<compile_context>
chip_gen: v7x
topology: tpu7x:2x2x1
jax: 0.10.0
libtpu: 0.0.40
codegen_flags: <defaults>
</compile_context>

<pallas_src>
import functools

import jax
import jax.numpy as jnp
from jax.experimental import pallas as pl
from jax.experimental.pallas import tpu as pltpu

RECONSTRUCTION_REGULARIZER = 0.0005

_LANE = 128
_SUBLANE = 8
# Total VMEM pipeline budget for the two streamed inputs (2 bufs each) plus the
# resident output/accumulator (2 bufs).  ~16 MiB keeps us inside every
# generation's scoped-VMEM comfort zone; vmem_limit_bytes is raised explicitly.
_TARGET_PIPELINE_BYTES = 16 * 1024 * 1024


def _cdiv(a, b):
    return (a + b - 1) // b


def _round_up(a, b):
    return _cdiv(a, b) * b


def _num_tensorcores():
    """Best-effort TensorCore count (2 on v7x/megacore, else 1). Never raises."""
    try:
        dev = jax.devices()[0]
    except Exception:
        return 1
    if getattr(dev, "platform", "") != "tpu":
        return 1
    info = None
    try:
        info = pltpu.get_tpu_info()
    except Exception:
        info = None
    candidates = ("num_cores", "core_count", "num_tensorcores",
                  "tensor_core_count", "cores_per_chip", "num_cores_per_chip")
    for obj in (info, dev):
        if obj is None:
            continue
        for name in candidates:
            val = getattr(obj, name, None)
            if val is None:
                continue
            try:
                n = int(val)
            except Exception:
                continue
            if n >= 1:
                return max(1, min(n, 8))
    return 1


def _recon_sq_colsum_kernel(img_ref, rec_ref, out_ref, *,
                            k_per_split, tile_cols, d_total, need_mask):
    """Streaming sum of squared diffs, folded into a resident per-column acc.

    out_ref: (1, tile_cols) f32 block, constant across the reduction axis ->
    acts as the accumulator (P3); written back to HBM when the split changes.
    """
    # Program ids are read only at the top level of the kernel (never inside a
    # pl.when body) -- this is what the previous version got wrong.
    s = pl.program_id(0)
    k = pl.program_id(1)

    @pl.when(k == 0)
    def _init():
        out_ref[...] = jnp.zeros(out_ref.shape, out_ref.dtype)

    diff = rec_ref[...].astype(jnp.float32) - img_ref[...].astype(jnp.float32)

    if need_mask:
        rows, cols = diff.shape
        # Flat (unclamped) column tile index -> global column base of this tile.
        col_base = (s * k_per_split + k) * tile_cols
        col_ids = col_base + jax.lax.broadcasted_iota(jnp.int32, (rows, cols), 1)
        # Mask BEFORE squaring: OOB lanes of a partial block hold stale /
        # uninitialized data (possibly NaN/Inf); select keeps them out entirely.
        diff = jnp.where(col_ids < d_total, diff, 0.0)

    # Pure sublane reduce into the resident (1, tile_cols) accumulator.
    out_ref[...] += jnp.sum(diff * diff, axis=0, keepdims=True)


def capsule_loss(images, labels, classes, reconstructions, *,
                 reconstruction_regularizer=RECONSTRUCTION_REGULARIZER,
                 max_tile_bytes=None, split=None):
    """images: [B, C, H, W] (any float dtype); labels, classes: [B, K];
    reconstructions: [B, C*H*W].  Returns the scalar CapsuleLoss."""
    b = int(reconstructions.shape[0])
    total = int(reconstructions.size)
    assert int(images.size) == total, "images and reconstructions must have equal numel"
    d = total // b

    # Free views (no pad copies of the big operands).
    images2d = images.reshape(b, d)
    recon2d = reconstructions.reshape(b, d)

    # ---- margin term: tiny (B*K elems), plain JAX per the perf review -------
    labels_f = labels.astype(jnp.float32)
    classes_f = classes.astype(jnp.float32)
    left = jnp.maximum(0.9 - classes_f, 0.0)
    right = jnp.maximum(classes_f - 0.1, 0.0)
    margin_sum = jnp.sum(labels_f * (left * left)
                         + 0.5 * (1.0 - labels_f) * (right * right))

    # ---- tiling of the (big) MSE operands ------------------------------------
    itemsize = max(int(jnp.dtype(images2d.dtype).itemsize),
                   int(jnp.dtype(recon2d.dtype).itemsize))
    row_pad = max(_SUBLANE, _round_up(b, _SUBLANE))      # VMEM sublane padding
    budget = _TARGET_PIPELINE_BYTES if max_tile_bytes is None else int(max_tile_bytes)
    # 2 inputs x 2 pipeline buffers x row_pad rows + output acc (2 bufs x 8 rows),
    # all in f32-sized VMEM lanes.
    bytes_per_col = 4 * (2 * 2 * row_pad + 2 * _SUBLANE)
    tile_cols = max(_LANE, (budget // bytes_per_col) // _LANE * _LANE)
    if tile_cols >= d:
        tile_cols = d                       # single full-width block (always legal)
    n_col_tiles = _cdiv(d, tile_cols)

    # Split the column-tile stream across TensorCores only if the chip has >1.
    n_split = _num_tensorcores() if split is None else int(split)
    n_split = max(1, min(n_split, n_col_tiles))
    k_per_split = _cdiv(n_col_tiles, n_split)
    last_tile = n_col_tiles - 1
    # Mask needed whenever the (split-rounded) tile grid overshoots D.
    need_mask = (n_split * k_per_split * tile_cols) != d

    def data_index(si, ki):
        # Clamp dummy tiles (only possible when n_col_tiles % n_split != 0) to a
        # valid block; the kernel mask zeroes their contribution anyway.
        return (0, jnp.minimum(si * k_per_split + ki, last_tile))

    data_spec = pl.BlockSpec((b, tile_cols), data_index)
    out_spec = pl.BlockSpec((None, 1, tile_cols), lambda si, ki: (si, 0, 0))

    kernel = functools.partial(
        _recon_sq_colsum_kernel,
        k_per_split=k_per_split, tile_cols=tile_cols, d_total=d,
        need_mask=need_mask)

    footprint = bytes_per_col * tile_cols
    vmem_limit = int(max(32 * 1024 * 1024, footprint + 8 * 1024 * 1024))
    # TODO(synk): for extremely large batch sizes (B >> 4096) the batch dim
    # should also be blocked; typical capsule-net batches never get there.

    partial_colsums = pl.pallas_call(
        kernel,
        out_shape=jax.ShapeDtypeStruct((n_split, 1, tile_cols), jnp.float32),
        grid_spec=pltpu.PrefetchScalarGridSpec(
            num_scalar_prefetch=0,
            grid=(n_split, k_per_split),
            in_specs=[data_spec, data_spec],
            out_specs=out_spec,
        ),
        compiler_params=pltpu.CompilerParams(
            dimension_semantics=("parallel", "arbitrary"),
            vmem_limit_bytes=vmem_limit),
        cost_estimate=pl.CostEstimate(
            flops=int(3 * b * d),
            transcendentals=0,
            bytes_accessed=int(2 * total * itemsize + n_split * tile_cols * 4)),
    )(images2d, recon2d)

    recon_sum = jnp.sum(partial_colsums)
    return (margin_sum + reconstruction_regularizer * recon_sum) / b


def _reference_loss(images, labels, classes, reconstructions):
    b = reconstructions.shape[0]
    images_flat = images.reshape(b, -1)
    left = jnp.maximum(0.9 - classes, 0.0) ** 2
    right = jnp.maximum(classes - 0.1, 0.0) ** 2
    margin = jnp.sum(labels * left + 0.5 * (1.0 - labels) * right)
    recon = jnp.sum((reconstructions - images_flat) ** 2)
    return (margin + RECONSTRUCTION_REGULARIZER * recon) / b


if __name__ == "__main__":
    key = jax.random.PRNGKey(0)

    def make_inputs(k, b, c, h, w, n_classes):
        k1, k2, k3, k4 = jax.random.split(k, 4)
        dsz = c * h * w
        images = jax.random.uniform(k1, (b, c, h, w), dtype=jnp.float32)
        label_idx = jax.random.randint(k2, (b,), 0, n_classes)
        labels = jax.nn.one_hot(label_idx, n_classes, dtype=jnp.float32)
        classes = jax.random.uniform(k3, (b, n_classes), dtype=jnp.float32)
        recon = jax.random.uniform(k4, (b, dsz), dtype=jnp.float32)
        return images, labels, classes, recon

    k1, k2, k3 = jax.random.split(key, 3)

    # 1) Small case: whole feature dim fits in one block (no masking).
    args = make_inputs(k1, 2, 4, 16, 16, 10)
    loss = jax.block_until_ready(capsule_loss(*args))
    ref = _reference_loss(*args)
    assert jnp.allclose(loss, ref, rtol=1e-5, atol=1e-5), (loss, ref)

    # 2) Ragged feature dim with many small column tiles and a forced 2-way
    #    split (23 valid tiles -> one clamped dummy tile + a masked ragged tail).
    args = make_inputs(k2, 4, 3, 31, 31, 10)
    loss = jax.block_until_ready(capsule_loss(*args, max_tile_bytes=8192, split=2))
    ref = _reference_loss(*args)
    assert jnp.allclose(loss, ref, rtol=1e-4, atol=1e-4), (loss, ref)

    # 3) Medium case on the automatic (device-derived) configuration.
    args = make_inputs(k3, 16, 4, 95, 95, 10)
    loss = jax.block_until_ready(capsule_loss(*args))
    ref = _reference_loss(*args)
    assert jnp.allclose(loss, ref, rtol=1e-4, atol=1e-4), (loss, ref)

    print("KERNEL_OK")
</pallas_src>

<mosaic_0001>
module attributes {stable_mosaic.version = 11 : i64} {
  func.func @_recon_sq_colsum_kernel(%arg0: i32, %arg1: i32, %arg2: memref<2x1024xf32, #tpu.memory_space<vmem>>, %arg3: memref<2x1024xf32, #tpu.memory_space<vmem>>, %arg4: memref<1x1x1024xf32, #tpu.memory_space<vmem>>) attributes {dimension_semantics = [#tpu.dimension_semantics<parallel>, #tpu.dimension_semantics<arbitrary>], iteration_bounds = array<i64: 1, 1>, scalar_prefetch = 0 : i64, scratch_operands = 0 : i64, tpu.core_type = #tpu.core_type<tc>, window_params = [{transform_indices = @transform_0, window_bounds = array<i64: 2, 1024>}, {transform_indices = @transform_1, window_bounds = array<i64: 2, 1024>}, {transform_indices = @transform_2, window_bounds = array<i64: 1, 1, 1024>}]} {
    %c0_i32 = arith.constant 0 : i32
    %0 = arith.cmpi eq, %arg1, %c0_i32 : i32
    %1 = arith.extui %0 : i1 to i32
    %c0_i32_0 = arith.constant 0 : i32
    %2 = arith.cmpi ne, %1, %c0_i32_0 : i32
    scf.if %2 {
      %cst_10 = arith.constant 0.000000e+00 : f32
      %15 = vector.broadcast %cst_10 : f32 to vector<1x1024xf32>
      %c0_11 = arith.constant 0 : index
      %c0_12 = arith.constant 0 : index
      %c0_13 = arith.constant 0 : index
      %16 = vector.load %arg4[%c0_11, %c0_12, %c0_13] : memref<1x1x1024xf32, #tpu.memory_space<vmem>>, vector<1x1x1024xf32>
      %17 = vector.shape_cast %16 : vector<1x1x1024xf32> to vector<1x1024xf32>
      %18 = vector.shape_cast %15 : vector<1x1024xf32> to vector<1x1x1024xf32>
      tpu.vector_store %arg4[%c0_11, %c0_12, %c0_13], %18 {strides = array<i32>} : memref<1x1x1024xf32, #tpu.memory_space<vmem>>, vector<1x1x1024xf32>,
    } else {
    }
    %c0 = arith.constant 0 : index
    %c0_1 = arith.constant 0 : index
    %3 = vector.load %arg3[%c0, %c0_1] : memref<2x1024xf32, #tpu.memory_space<vmem>>, vector<2x1024xf32>
    %c0_2 = arith.constant 0 : index
    %c0_3 = arith.constant 0 : index
    %4 = vector.load %arg2[%c0_2, %c0_3] : memref<2x1024xf32, #tpu.memory_space<vmem>>, vector<2x1024xf32>
    %5 = arith.subf %3, %4 : vector<2x1024xf32>
    %c0_4 = arith.constant 0 : index
    %c0_5 = arith.constant 0 : index
    %c0_6 = arith.constant 0 : index
    %6 = vector.load %arg4[%c0_4, %c0_5, %c0_6] : memref<1x1x1024xf32, #tpu.memory_space<vmem>>, vector<1x1x1024xf32>
    %7 = vector.shape_cast %6 : vector<1x1x1024xf32> to vector<1x1024xf32>
    %8 = arith.mulf %5, %5 : vector<2x1024xf32>
    %cst = arith.constant dense<0.000000e+00> : vector<1024xf32>
    %9 = vector.multi_reduction <add>, %8, %cst [0] : vector<2x1024xf32> to vector<1024xf32>
    %10 = vector.shape_cast %9 : vector<1024xf32> to vector<1x1024xf32>
    %11 = arith.addf %7, %10 : vector<1x1024xf32>
    %c0_7 = arith.constant 0 : index
    %c0_8 = arith.constant 0 : index
    %c0_9 = arith.constant 0 : index
    %12 = vector.load %arg4[%c0_7, %c0_8, %c0_9] : memref<1x1x1024xf32, #tpu.memory_space<vmem>>, vector<1x1x1024xf32>
    %13 = vector.shape_cast %12 : vector<1x1x1024xf32> to vector<1x1024xf32>
    %14 = vector.shape_cast %11 : vector<1x1024xf32> to vector<1x1x1024xf32>
    tpu.vector_store %arg4[%c0_7, %c0_8, %c0_9], %14 {strides = array<i32>} : memref<1x1x1024xf32, #tpu.memory_space<vmem>>, vector<1x1x1024xf32>,
    return
  }
  func.func @transform_0(%arg0: i32, %arg1: i32) -> (i32, i32) {
    %c1_i32 = arith.constant 1 : i32
    %0 = arith.muli %arg0, %c1_i32 : i32
    %1 = arith.addi %0, %arg1 : i32
    %c0_i32 = arith.constant 0 : i32
    %2 = arith.minsi %1, %c0_i32 : i32
    %c0_i32_0 = arith.constant 0 : i32
    %c0_i32_1 = arith.constant 0 : i32
    return %c0_i32_0, %2 : i32, i32
  }
  func.func @transform_1(%arg0: i32, %arg1: i32) -> (i32, i32) {
    %c1_i32 = arith.constant 1 : i32
    %0 = arith.muli %arg0, %c1_i32 : i32
    %1 = arith.addi %0, %arg1 : i32
    %c0_i32 = arith.constant 0 : i32
    %2 = arith.minsi %1, %c0_i32 : i32
    %c0_i32_0 = arith.constant 0 : i32
    %c0_i32_1 = arith.constant 0 : i32
    return %c0_i32_0, %2 : i32, i32
  }
  func.func @transform_2(%arg0: i32, %arg1: i32) -> (i32, i32, i32) {
    %c0_i32 = arith.constant 0 : i32
    %c0_i32_0 = arith.constant 0 : i32
    %c0_i32_1 = arith.constant 0 : i32
    return %arg0, %c0_i32, %c0_i32_0 : i32, i32, i32
  }
}

</mosaic_0001>

<llo_original>
// kernel: tpu_custom_call.1
$region0: #{tpu_custom_call.1}
  #allocation0 [shape = 'u32[]', space=smem, size = 0x4, offset = 0x4, fixed_abs, tag = 'smem constant byte address 0x4 - core index']
  #allocation1 [shape = 'u32[144,128]{1,0:T(1,128)}', space=vmem, size = 0x12000, scoped, tag = 'internal scratch']
  %s0 = inlined_call_operand.hbm [shape: f32[2,1024], index: 0, kind: input, shape index: {}]
  %s1 = inlined_call_operand.hbm [shape: f32[2,1024], index: 1, kind: input, shape index: {}]
  %s2 = inlined_call_operand.hbm [shape: f32[1,1,1024], index: 2, kind: output, shape index: {}]
  %s3 = sld [smem:[#allocation0]]
  $region30: #{tpu_custom_call.1} parent=0
    _
  %s5 = ssub.s32 1, %s3
  %s6 = scalar_select 0, %s5, %s3
  $region1: #{tpu_custom_call.1} parent=0
    #allocation2 [shape = 'u8[8192]{0}', space=vmem, size = 0x2000, scoped, tag = 'input window, operand 0, single buffered']
    #allocation3 [shape = 's32[1]{0}', space=sflag, size = 0x4, scoped, tag = 'scoped memory for tpu_custom_call.1']
    #allocation4 [shape = 's32[1]{0}', space=sflag, size = 0x4, scoped, tag = 'scoped memory for tpu_custom_call.1']
    #allocation5 [shape = 'u8[8192]{0}', space=vmem, size = 0x2000, scoped, tag = 'input window, operand 1, single buffered']
    #allocation6 [shape = 's32[1]{0}', space=sflag, size = 0x4, scoped, tag = 'scoped memory for tpu_custom_call.1']
    #allocation7 [shape = 'u8[4096]{0}', space=vmem, size = 0x1000, scoped, tag = 'output window, operand 0, single buffered']
    %7 = vsyncpa [#allocation3], 0
    %8 = vsyncpa [#allocation6], 0
    %9 = vsyncpa [#allocation4], 0
    // Predicated region
    $region2: #{tpu_custom_call.1} parent=1 // pred_check
      _
    $region3: #{tpu_custom_call.1} parent=1 // pred_check_branch
      %11 = sbr.rel (0) target = $region5
    $region4: #{tpu_custom_call.1} parent=1 // pred_region
      %s12 = sadd.s32 0, 0
      %p13 = scmp.lt.s32.totalorder %s12, 0
      %s14 = scalar_select %p13, %s12, 0
      %s15 = smul.u32 8, %s14
      %s17 = ssub.s32 256, 256
      %18 = vsyncadd [#allocation3], %s17
      %s19 = smul.addr %s15, 32
      %s20 = scalar_lea.hbm %s0, %s19
      %s22 = sshll.u32 [#allocation2], 4
      %s23 = int_to_ptr.vmem [resolvable:$true] %s22
      %25 = dma.hbm_to_vmem [thread:$0]  %s20, 256, %s23, [#allocation3]
    $region5: #{tpu_custom_call.1} parent=1 // pred_fallthru
      _
    // Predicated region
    $region6: #{tpu_custom_call.1} parent=1 // pred_check
      _
    $region7: #{tpu_custom_call.1} parent=1 // pred_check_branch
      %27 = sbr.rel (0) target = $region9
    $region8: #{tpu_custom_call.1} parent=1 // pred_region
      %s28 = sadd.s32 0, 0
      %p29 = scmp.lt.s32.totalorder %s28, 0
      %s30 = scalar_select %p29, %s28, 0
      %s31 = smul.u32 8, %s30
      %s33 = ssub.s32 256, 256
      %34 = vsyncadd [#allocation6], %s33
      %s35 = smul.addr %s31, 32
      %s36 = scalar_lea.hbm %s1, %s35
      %s38 = sshll.u32 [#allocation5], 4
      %s39 = int_to_ptr.vmem [resolvable:$true] %s38
      %41 = dma.hbm_to_vmem [thread:$0]  %s36, 256, %s39, [#allocation6]
    $region9: #{tpu_custom_call.1} parent=1 // pred_fallthru
      _
    // Predicated region
    $region10: #{tpu_custom_call.1} parent=1 // pred_check
      _
    $region11: #{tpu_custom_call.1} parent=1 // pred_check_branch
      %43 = sbr.rel (0) target = $region13
    $region12: #{tpu_custom_call.1} parent=1 // pred_region
      %44 = dma.done [#allocation3], 256
    $region13: #{tpu_custom_call.1} parent=1 // pred_fallthru
      _
    // Predicated region
    $region14: #{tpu_custom_call.1} parent=1 // pred_check
      _
    $region15: #{tpu_custom_call.1} parent=1 // pred_check_branch
      %46 = sbr.rel (0) target = $region17
    $region16: #{tpu_custom_call.1} parent=1 // pred_region
      %47 = dma.done [#allocation6], 256
    $region17: #{tpu_custom_call.1} parent=1 // pred_fallthru
      _
    %s48 = sadd.s32 0, 0
    %p49 = scmp.lt.s32.totalorder %s48, 0
    %s50 = scalar_select %p49, %s48, 0
    %s51 = smul.u32 8, %s50
    %s52 = sadd.s32 0, 0
    %p53 = scmp.lt.s32.totalorder %s52, 0
    %s54 = scalar_select %p53, %s52, 0
    %s55 = smul.u32 8, %s54
    %p56 = scmp.eq.s32.totalorder 0, 0
    // Predicated region
    $region18: #{tpu_custom_call.1} parent=1 // pred_check
      %p57 = pneg %p56
    $region19: #{tpu_custom_call.1} parent=1 // pred_check_branch
      %59 = sbr.rel (%p57) target = $region21
    $region20: #{tpu_custom_call.1} parent=1 // pred_region
      %60 = vst [vmem:[#allocation7] sm:$0xff] 0.0
    $region21: #{tpu_custom_call.1} parent=1 // pred_fallthru
      _
    %v61 = vld [vmem:[#allocation5] sm:$0xff]
    %v62 = vld [vmem:[#allocation5 + $0x8] sm:$0xff]
    %v63 = vld [vmem:[#allocation2] sm:$0xff]
    %v64 = vld [vmem:[#allocation2 + $0x8] sm:$0xff]
    %v65 = vsub.f32 %v61, %v63
    %v66 = vsub.f32 %v62, %v64
    %v67 = vld [vmem:[#allocation7] sm:$0xff]
    %v68 = vmul.f32 %v65, %v65
    %v69 = vmul.f32 %v66, %v66
    %v72 = vcombine.high %v68, %v68
    %v74 = vunpack.c.l.s4 1983009808
    %v75 = vunpack.c.0.s8 %v74
    %v76 = vlaneseq
    %v77 = vshrl.u32 %v76, 7
    %v78 = vsub.s32 %v75, %v77
    %v79 = vrot.slane %v68, %v78
    %v81 = vunpack.c.l.s4 1983009808
    %v82 = vunpack.c.0.s8 %v81
    %v83 = vlaneseq
    %v84 = vshrl.u32 %v83, 7
    %v85 = vsub.s32 %v82, %v84
    %v86 = vrot.slane %v72, %v85
    %v87 = vcombine.high %v79, %v79
    %v88 = vcombine.high %v86, %v86
    %v89 = vcombine.high %v69, %v69
    %v91 = vunpack.c.l.s4 1983009808
    %v92 = vunpack.c.0.s8 %v91
    %v93 = vlaneseq
    %v94 = vshrl.u32 %v93, 7
    %v95 = vsub.s32 %v92, %v94
    %v96 = vrot.slane %v69, %v95
    %v98 = vunpack.c.l.s4 1983009808
    %v99 = vunpack.c.0.s8 %v98
    %v100 = vlaneseq
    %v101 = vshrl.u32 %v100, 7
    %v102 = vsub.s32 %v99, %v101
    %v103 = vrot.slane %v89, %v102
    %v104 = vcombine.high %v96, %v96
    %v105 = vcombine.high %v103, %v103
    %vm114 = vcmask 1041408
    %v115 = vsel %vm114, %v79, 0.0
    %v116 = vrot.slane %v115, 4
    %v117 = vadd.f32 %v115, %v116
    %v118 = vrot.slane %v117, 2
    %v119 = vadd.f32 %v117, %v118
    %v120 = vrot.slane %v119, 1
    %v121 = vadd.f32 %v119, %v120
    %v122 = vsel %vm114, %v87, 0.0
    %v123 = vrot.slane %v122, 4
    %v124 = vadd.f32 %v122, %v123
    %v125 = vrot.slane %v124, 2
    %v126 = vadd.f32 %v124, %v125
    %v127 = vrot.slane %v126, 1
    %v128 = vadd.f32 %v126, %v127
    %v129 = vsel %vm114, %v86, 0.0
    %v130 = vrot.slane %v129, 4
    %v131 = vadd.f32 %v129, %v130
    %v132 = vrot.slane %v131, 2
    %v133 = vadd.f32 %v131, %v132
    %v134 = vrot.slane %v133, 1
    %v135 = vadd.f32 %v133, %v134
    %v136 = vsel %vm114, %v88, 0.0
    %v137 = vrot.slane %v136, 4
    %v138 = vadd.f32 %v136, %v137
    %v139 = vrot.slane %v138, 2
    %v140 = vadd.f32 %v138, %v139
    %v141 = vrot.slane %v140, 1
    %v142 = vadd.f32 %v140, %v141
    %v143 = vsel %vm114, %v96, 0.0
    %v144 = vrot.slane %v143, 4
    %v145 = vadd.f32 %v143, %v144
    %v146 = vrot.slane %v145, 2
    %v147 = vadd.f32 %v145, %v146
    %v148 = vrot.slane %v147, 1
    %v149 = vadd.f32 %v147, %v148
    %v150 = vsel %vm114, %v104, 0.0
    %v151 = vrot.slane %v150, 4
    %v152 = vadd.f32 %v150, %v151
    %v153 = vrot.slane %v152, 2
    %v154 = vadd.f32 %v152, %v153
    %v155 = vrot.slane %v154, 1
    %v156 = vadd.f32 %v154, %v155
    %v157 = vsel %vm114, %v103, 0.0
    %v158 = vrot.slane %v157, 4
    %v159 = vadd.f32 %v157, %v158
    %v160 = vrot.slane %v159, 2
    %v161 = vadd.f32 %v159, %v160
    %v162 = vrot.slane %v161, 1
    %v163 = vadd.f32 %v161, %v162
    %v164 = vsel %vm114, %v105, 0.0
    %v165 = vrot.slane %v164, 4
    %v166 = vadd.f32 %v164, %v165
    %v167 = vrot.slane %v166, 2
    %v168 = vadd.f32 %v166, %v167
    %v169 = vrot.slane %v168, 1
    %v170 = vadd.f32 %v168, %v169
    %v179 = vcombine.low %v121, %v128
    %v180 = vcombine.low %v135, %v142
    %v181 = vcombine.low %v149, %v156
    %v182 = vcombine.low %v163, %v170
    %v184 = vunpack.c.l.s4 1966171168
    %v185 = vunpack.c.0.s8 %v184
    %v186 = vlaneseq
    %v187 = vshrl.u32 %v186, 7
    %v188 = vsub.s32 %v185, %v187
    %v189 = vrot.slane %v179, %v188
    %v191 = vunpack.c.l.s4 1966171168
    %v192 = vunpack.c.0.s8 %v191
    %v193 = vlaneseq
    %v194 = vshrl.u32 %v193, 7
    %v195 = vsub.s32 %v192, %v194
    %v196 = vrot.slane %v180, %v195
    %v198 = vunpack.c.l.s4 1966171168
    %v199 = vunpack.c.0.s8 %v198
    %v200 = vlaneseq
    %v201 = vshrl.u32 %v200, 7
    %v202 = vsub.s32 %v199, %v201
    %v203 = vrot.slane %v181, %v202
    %v205 = vunpack.c.l.s4 1966171168
    %v206 = vunpack.c.0.s8 %v205
    %v207 = vlaneseq
    %v208 = vshrl.u32 %v207, 7
    %v209 = vsub.s32 %v206, %v208
    %v210 = vrot.slane %v182, %v209
    %v211 = vcombine.low %v189, %v196
    %v212 = vcombine.low %v203, %v210
    %v214 = vunpack.c.l.s4 1966171168
    %v215 = vunpack.c.0.s8 %v214
    %v216 = vlaneseq
    %v217 = vshrl.u32 %v216, 7
    %v218 = vsub.s32 %v215, %v217
    %v219 = vrot.slane %v211, %v218
    %v221 = vunpack.c.l.s4 1966171168
    %v222 = vunpack.c.0.s8 %v221
    %v223 = vlaneseq
    %v224 = vshrl.u32 %v223, 7
    %v225 = vsub.s32 %v222, %v224
    %v226 = vrot.slane %v212, %v225
    %v227 = vcombine.low %v219, %v226
    %v229 = vadd.f32 %v67, %v227
    %230 = vst [vmem:[#allocation7] sm:$0xff] %v229
    // Predicated region
    $region22: #{tpu_custom_call.1} parent=1 // pred_check
      _
    $region23: #{tpu_custom_call.1} parent=1 // pred_check_branch
      %232 = sbr.rel (0) target = $region25
    $region24: #{tpu_custom_call.1} parent=1 // pred_region
      %s234 = ssub.s32 128, 128
      %235 = vsyncadd [#allocation4], %s234
      %s237 = sshll.u32 [#allocation7], 4
      %s238 = int_to_ptr.vmem [resolvable:$true] %s237
      %240 = dma.vmem_to_hbm [thread:$0]  %s238, 128, %s2, [#allocation4]
    $region25: #{tpu_custom_call.1} parent=1 // pred_fallthru
      _
    // Predicated region
    $region26: #{tpu_custom_call.1} parent=1 // pred_check
      _
    $region27: #{tpu_custom_call.1} parent=1 // pred_check_branch
      %242 = sbr.rel (0) target = $region29
    $region28: #{tpu_custom_call.1} parent=1 // pred_region
      %243 = dma.done [#allocation4], 128
    $region29: #{tpu_custom_call.1} parent=1 // pred_fallthru
      _
    %244 = vsyncpa [#allocation3], 1
    %245 = vsyncpa [#allocation6], 1
    %246 = vsyncpa [#allocation4], 1

</llo_original>
